<compile_context>
chip_gen: v6e
topology: v6e:2x2x1
jax: 0.10.0
libtpu: 0.0.40
codegen_flags: <defaults>
</compile_context>

<pallas_src>
import functools

import jax
import jax.numpy as jnp
from jax.experimental import pallas as pl
from jax.experimental.pallas import tpu as pltpu


def attention_kernel(hidden_ref, enc_ref, vh_ref, vf_ref, c_ref,
                     weight_ref, attres_ref):
    """Lane-dense (batch-last) layout:
         hidden_ref : (H, tb)      enc_ref    : (L, F, tb)
         vh_ref     : (H, 1)       vf_ref     : (F, 1)
         c_ref      : (1, 1) SMEM scalar
         weight_ref : (L, tb)      attres_ref : (F, tb)
       tb (the batch tile) sits on the 128-wide lane axis, so vregs are lane-dense
       and output stores are unmasked; reductions over H/F are sublane work and
       the att_res reduction over L is a leading-axis VALU accumulation.
    """
    L = enc_ref.shape[0]
    c = c_ref[0, 0]

    vh = vh_ref[...]                                           # (H, 1)
    vf = vf_ref[...]                                           # (F, 1)

    # Folded hidden-side contribution: (1, tb).
    h_part = jnp.sum(hidden_ref[...].astype(jnp.float32) * vh,
                     axis=0, keepdims=True)

    # Folded feature-side contribution: reduce over F -> (L, tb).
    e_part = jnp.sum(enc_ref[...].astype(jnp.float32) * vf[None, :, :], axis=1)

    # energies = tanh(hidden@vh + enc@vf + c); softmax over L (axis 0).
    energies = jnp.tanh(e_part + h_part + c)                   # (L, tb)
    e_max = jnp.max(energies, axis=0, keepdims=True)
    p = jnp.exp(energies - e_max)
    denom = jnp.sum(p, axis=0, keepdims=True)
    # EUP approximate reciprocal: separate VLIW slot from the VALU multiplies.
    weight = p * pl.reciprocal(denom, approx=True)             # (L, tb)
    weight_ref[...] = weight.astype(weight_ref.dtype)

    # att_res = sum_l weight[l] * enc[l]  -> (F, tb).
    # Unrolled over the small static L axis: streams one (F, tb) slice of enc
    # per step (enc is NOT kept live across the softmax -> bounded vreg
    # pressure with large batch tiles) and keeps the accumulation on the VALU.
    acc = weight[0:1, :] * enc_ref[0].astype(jnp.float32)
    for l in range(1, L):
        acc = acc + weight[l:l + 1, :] * enc_ref[l].astype(jnp.float32)
    attres_ref[...] = acc.astype(attres_ref.dtype)


def _cdiv(a, b):
    return -(-a // b)


def _batch_tile_and_vmem_limit(B, L, F, H, itemsize, batch_block):
    """Derive the batch (lane) tile from this generation's VMEM capacity."""
    try:
        vmem_cap = int(pltpu.get_tpu_info().vmem_capacity_bytes)
    except Exception:
        vmem_cap = 64 * 1024 * 1024            # conservative fallback (v7x per-TC)

    # Double-buffered enc tile dominates; hidden + both f32 outputs also scale.
    per_elem = 2 * itemsize * (L * F + H) + 2 * 4 * (L + F)
    tb_cap = max(1, int(0.40 * vmem_cap) // per_elem)

    if batch_block is not None:
        tb = batch_block
    elif B <= 128:
        tb = B                                  # full-extent lane block
    else:
        # Lane-aligned tiling: the block's last dim must be a multiple of 128.
        tb = max(128, (min(tb_cap, B) // 128) * 128)
        # v7x megacore: prefer >= 2 grid steps so both TensorCores get work.
        if _cdiv(B, tb) < 2:
            tb = max(128, 128 * _cdiv(_cdiv(B, 2), 128))

    vmem_limit = max(32 * 1024 * 1024,
                     min(int(0.70 * vmem_cap), 96 * 1024 * 1024))
    return tb, int(vmem_limit)


def fold_attention_params(params, hidden_size):
    """Fold attn + linear_out (two back-to-back Linears) into vh, vf, c (once)."""
    w1, b1, w2, b2 = params["w1"], params["b1"], params["w2"], params["b2"]
    H = hidden_size
    v = w2.reshape(-1)                                   # (M,)
    vh = jnp.transpose(w1[:, :H]) @ v                    # (H,)
    vf = jnp.transpose(w1[:, H:]) @ v                    # (F,)
    c = jnp.dot(b1, v) + b2.reshape(())                  # scalar
    return {
        "vh": vh.reshape(-1, 1).astype(jnp.float32),     # (H, 1)
        "vf": vf.reshape(-1, 1).astype(jnp.float32),     # (F, 1)
        "c":  c.reshape(1, 1).astype(jnp.float32),       # (1, 1) -> SMEM
    }


@functools.partial(jax.jit, static_argnames=("batch_block", "input_dtype"))
def attention_forward(hidden, encoder_outputs, folded, batch_block=None,
                      input_dtype=None):
    """hidden: (B,H); encoder_outputs: (B,L,F); folded from fold_attention_params.

    Returns (weight (B,L), att_res (B,F)), both float32. `input_dtype=jnp.bfloat16`
    halves HBM traffic on v6e/v7x (compute stays f32 inside the kernel).
    """
    B, H = hidden.shape
    _, L, F = encoder_outputs.shape
    vh, vf, c = folded["vh"], folded["vf"], folded["c"]

    if input_dtype is not None:
        hidden = hidden.astype(input_dtype)
        encoder_outputs = encoder_outputs.astype(input_dtype)

    # Lane-dense layout: batch axis last so it maps onto the 128-wide lane dim.
    hidden_t = jnp.transpose(hidden)                     # (H, B)
    enc_t = jnp.transpose(encoder_outputs, (1, 2, 0))    # (L, F, B)

    itemsize = encoder_outputs.dtype.itemsize
    tb, vmem_limit = _batch_tile_and_vmem_limit(B, L, F, H, itemsize, batch_block)
    grid = (pl.cdiv(B, tb),)

    cost = pl.CostEstimate(
        flops=4 * B * L * F + 2 * B * H,
        transcendentals=2 * B * L + B,
        bytes_accessed=itemsize * B * (L * F + H) + 4 * B * (L + F),
    )

    weight_t, attres_t = pl.pallas_call(
        attention_kernel,
        out_shape=(jax.ShapeDtypeStruct((L, B), jnp.float32),
                   jax.ShapeDtypeStruct((F, B), jnp.float32)),
        grid=grid,
        in_specs=[
            pl.BlockSpec((H, tb),    lambda i: (0, i)),            # hidden^T
            pl.BlockSpec((L, F, tb), lambda i: (0, 0, i)),         # enc^T
            pl.BlockSpec((H, 1),     lambda i: (0, 0)),            # vh (shared)
            pl.BlockSpec((F, 1),     lambda i: (0, 0)),            # vf (shared)
            pl.BlockSpec(memory_space=pltpu.MemorySpace.SMEM),     # c scalar
        ],
        out_specs=(
            pl.BlockSpec((L, tb), lambda i: (0, i)),               # weight^T
            pl.BlockSpec((F, tb), lambda i: (0, i)),               # att_res^T
        ),
        compiler_params=pltpu.CompilerParams(
            dimension_semantics=("parallel",),                     # megacore on v7x
            vmem_limit_bytes=vmem_limit),
        cost_estimate=cost,
    )(hidden_t, enc_t, vh, vf, c)

    return jnp.transpose(weight_t), jnp.transpose(attres_t)


def init_params(key, hidden_size, feature_size):
    """Deterministic nn.Linear-style init: U(-1/sqrt(fan_in), 1/sqrt(fan_in))."""
    in1 = hidden_size + feature_size
    mid = (hidden_size + feature_size) // 2
    k1, k2, k3, k4 = jax.random.split(key, 4)
    lim1 = 1.0 / jnp.sqrt(in1)
    lim2 = 1.0 / jnp.sqrt(mid)
    return {
        "w1": jax.random.uniform(k1, (mid, in1), jnp.float32, -lim1, lim1),
        "b1": jax.random.uniform(k2, (mid,),     jnp.float32, -lim1, lim1),
        "w2": jax.random.uniform(k3, (1, mid),   jnp.float32, -lim2, lim2),
        "b2": jax.random.uniform(k4, (1,),       jnp.float32, -lim2, lim2),
    }


def attention_reference(hidden, encoder_outputs, params):
    """Pure-JAX transcription of the PyTorch forward (for correctness check)."""
    B, H = hidden.shape
    L = encoder_outputs.shape[1]
    w1, b1, w2, b2 = params["w1"], params["b1"], params["w2"], params["b2"]
    hidden_rep = jnp.broadcast_to(hidden[:, None, :], (B, L, H))
    cat = jnp.concatenate([hidden_rep, encoder_outputs], axis=2)
    mid = cat @ w1.T + b1
    energies = jnp.tanh(mid @ w2.T + b2)[..., 0]
    weight = jax.nn.softmax(energies, axis=1)
    att_res = jnp.einsum('bl,blf->bf', weight, encoder_outputs)
    return weight, att_res


if __name__ == "__main__":
    B, L = 2, 8
    hidden_size, feature_size = 32, 32

    key = jax.random.PRNGKey(0)
    k_h, k_e, k_p = jax.random.split(key, 3)
    hidden = jax.random.normal(k_h, (B, hidden_size), jnp.float32)
    encoder_outputs = jax.random.normal(k_e, (B, L, feature_size), jnp.float32)
    params = init_params(k_p, hidden_size, feature_size)

    # Weight folding hoisted out of the per-call path (done once at init).
    folded = fold_attention_params(params, hidden_size)

    # TODO(synk): encoder_mask branch (mask * renormalize) not implemented; the
    # default encoder_mask=None path of the reference is what is fused here.
    weight, att_res = attention_forward(hidden, encoder_outputs, folded)
    jax.block_until_ready((weight, att_res))

    assert weight.shape == (B, L)
    assert att_res.shape == (B, feature_size)

    # Check vs. the unfused reference. Tolerance covers the fp32 reduction
    # reordering of the fold plus the EUP approximate reciprocal in softmax.
    w_ref, a_ref = attention_reference(hidden, encoder_outputs, params)
    assert jnp.allclose(weight, w_ref, atol=1e-3, rtol=1e-3)
    assert jnp.allclose(att_res, a_ref, atol=1e-3, rtol=1e-3)

    print("KERNEL_OK")
</pallas_src>

<mosaic_0001>
module attributes {stable_mosaic.version = 11 : i64} {
  func.func @attention_kernel(%arg0: i32, %arg1: memref<32x2xf32, #tpu.memory_space<vmem>>, %arg2: memref<8x32x2xf32, #tpu.memory_space<vmem>>, %arg3: memref<32x1xf32, #tpu.memory_space<vmem>>, %arg4: memref<32x1xf32, #tpu.memory_space<vmem>>, %arg5: memref<1x1xf32, #tpu.memory_space<smem>>, %arg6: memref<8x2xf32, #tpu.memory_space<vmem>>, %arg7: memref<32x2xf32, #tpu.memory_space<vmem>>) attributes {dimension_semantics = [#tpu.dimension_semantics<parallel>], iteration_bounds = array<i64: 1>, scalar_prefetch = 0 : i64, scratch_operands = 0 : i64, tpu.core_type = #tpu.core_type<tc>, window_params = [{transform_indices = @transform_0, window_bounds = array<i64: 32, 2>}, {transform_indices = @transform_1, window_bounds = array<i64: 8, 32, 2>}, {pipeline_mode = #tpu.pipeline_mode<synchronous>, transform_indices = @transform_2, window_bounds = array<i64: 32, 1>}, {pipeline_mode = #tpu.pipeline_mode<synchronous>, transform_indices = @transform_3, window_bounds = array<i64: 32, 1>}, {transform_indices = @transform_4, window_bounds = array<i64: 1, 1>}, {transform_indices = @transform_5, window_bounds = array<i64: 8, 2>}, {transform_indices = @transform_6, window_bounds = array<i64: 32, 2>}]} {
    %c0 = arith.constant 0 : index
    %c0_0 = arith.constant 0 : index
    %0 = memref.load %arg5[%c0, %c0_0] : memref<1x1xf32, #tpu.memory_space<smem>>
    %c0_1 = arith.constant 0 : index
    %c0_2 = arith.constant 0 : index
    %1 = vector.load %arg3[%c0_1, %c0_2] : memref<32x1xf32, #tpu.memory_space<vmem>>, vector<32x1xf32>
    %c0_3 = arith.constant 0 : index
    %c0_4 = arith.constant 0 : index
    %2 = vector.load %arg4[%c0_3, %c0_4] : memref<32x1xf32, #tpu.memory_space<vmem>>, vector<32x1xf32>
    %c0_5 = arith.constant 0 : index
    %c0_6 = arith.constant 0 : index
    %3 = vector.load %arg1[%c0_5, %c0_6] : memref<32x2xf32, #tpu.memory_space<vmem>>, vector<32x2xf32>
    %4 = vector.broadcast %1 : vector<32x1xf32> to vector<32x2xf32>
    %5 = arith.mulf %3, %4 : vector<32x2xf32>
    %cst = arith.constant dense<0.000000e+00> : vector<2xf32>
    %6 = vector.multi_reduction <add>, %5, %cst [0] : vector<32x2xf32> to vector<2xf32>
    %7 = vector.shape_cast %6 : vector<2xf32> to vector<1x2xf32>
    %c0_7 = arith.constant 0 : index
    %c0_8 = arith.constant 0 : index
    %c0_9 = arith.constant 0 : index
    %8 = vector.load %arg2[%c0_7, %c0_8, %c0_9] : memref<8x32x2xf32, #tpu.memory_space<vmem>>, vector<8x32x2xf32>
    %9 = vector.shape_cast %2 : vector<32x1xf32> to vector<1x32x1xf32>
    %10 = vector.broadcast %9 : vector<1x32x1xf32> to vector<8x32x2xf32>
    %11 = arith.mulf %8, %10 : vector<8x32x2xf32>
    %cst_10 = arith.constant dense<0.000000e+00> : vector<8x2xf32>
    %12 = vector.multi_reduction <add>, %11, %cst_10 [1] : vector<8x32x2xf32> to vector<8x2xf32>
    %13 = vector.broadcast %7 : vector<1x2xf32> to vector<8x2xf32>
    %14 = arith.addf %12, %13 : vector<8x2xf32>
    %15 = vector.broadcast %0 : f32 to vector<8x2xf32>
    %16 = arith.addf %14, %15 : vector<8x2xf32>
    %17 = math.tanh %16 : vector<8x2xf32>
    %cst_11 = arith.constant dense<0xFF800000> : vector<2xf32>
    %18 = vector.multi_reduction <maximumf>, %17, %cst_11 [0] : vector<8x2xf32> to vector<2xf32>
    %19 = vector.shape_cast %18 : vector<2xf32> to vector<1x2xf32>
    %20 = vector.broadcast %19 : vector<1x2xf32> to vector<8x2xf32>
    %21 = arith.subf %17, %20 : vector<8x2xf32>
    %22 = math.exp %21 : vector<8x2xf32>
    %cst_12 = arith.constant dense<0.000000e+00> : vector<2xf32>
    %23 = vector.multi_reduction <add>, %22, %cst_12 [0] : vector<8x2xf32> to vector<2xf32>
    %24 = vector.shape_cast %23 : vector<2xf32> to vector<1x2xf32>
    %25 = tpu.reciprocal %24 {approx = true} : vector<1x2xf32> -> vector<1x2xf32>
    %26 = vector.broadcast %25 : vector<1x2xf32> to vector<8x2xf32>
    %27 = arith.mulf %22, %26 : vector<8x2xf32>
    %c0_13 = arith.constant 0 : index
    %c0_14 = arith.constant 0 : index
    %28 = vector.load %arg6[%c0_13, %c0_14] : memref<8x2xf32, #tpu.memory_space<vmem>>, vector<8x2xf32>
    tpu.vector_store %arg6[%c0_13, %c0_14], %27 {strides = array<i32>} : memref<8x2xf32, #tpu.memory_space<vmem>>, vector<8x2xf32>,
    %29 = vector.extract_strided_slice %27 {offsets = [0, 0], sizes = [1, 2], strides = [1, 1]} : vector<8x2xf32> to vector<1x2xf32>
    %c0_15 = arith.constant 0 : index
    %c0_16 = arith.constant 0 : index
    %c0_17 = arith.constant 0 : index
    %30 = vector.load %arg2[%c0_15, %c0_16, %c0_17] : memref<8x32x2xf32, #tpu.memory_space<vmem>>, vector<1x32x2xf32>
    %31 = vector.shape_cast %30 : vector<1x32x2xf32> to vector<32x2xf32>
    %32 = vector.broadcast %29 : vector<1x2xf32> to vector<32x2xf32>
    %33 = arith.mulf %32, %31 : vector<32x2xf32>
    %34 = vector.extract_strided_slice %27 {offsets = [1, 0], sizes = [1, 2], strides = [1, 1]} : vector<8x2xf32> to vector<1x2xf32>
    %c1 = arith.constant 1 : index
    %c0_18 = arith.constant 0 : index
    %c0_19 = arith.constant 0 : index
    %35 = vector.load %arg2[%c1, %c0_18, %c0_19] : memref<8x32x2xf32, #tpu.memory_space<vmem>>, vector<1x32x2xf32>
    %36 = vector.shape_cast %35 : vector<1x32x2xf32> to vector<32x2xf32>
    %37 = vector.broadcast %34 : vector<1x2xf32> to vector<32x2xf32>
    %38 = arith.mulf %37, %36 : vector<32x2xf32>
    %39 = arith.addf %33, %38 : vector<32x2xf32>
    %40 = vector.extract_strided_slice %27 {offsets = [2, 0], sizes = [1, 2], strides = [1, 1]} : vector<8x2xf32> to vector<1x2xf32>
    %c2 = arith.constant 2 : index
    %c0_20 = arith.constant 0 : index
    %c0_21 = arith.constant 0 : index
    %41 = vector.load %arg2[%c2, %c0_20, %c0_21] : memref<8x32x2xf32, #tpu.memory_space<vmem>>, vector<1x32x2xf32>
    %42 = vector.shape_cast %41 : vector<1x32x2xf32> to vector<32x2xf32>
    %43 = vector.broadcast %40 : vector<1x2xf32> to vector<32x2xf32>
    %44 = arith.mulf %43, %42 : vector<32x2xf32>
    %45 = arith.addf %39, %44 : vector<32x2xf32>
    %46 = vector.extract_strided_slice %27 {offsets = [3, 0], sizes = [1, 2], strides = [1, 1]} : vector<8x2xf32> to vector<1x2xf32>
    %c3 = arith.constant 3 : index
    %c0_22 = arith.constant 0 : index
    %c0_23 = arith.constant 0 : index
    %47 = vector.load %arg2[%c3, %c0_22, %c0_23] : memref<8x32x2xf32, #tpu.memory_space<vmem>>, vector<1x32x2xf32>
    %48 = vector.shape_cast %47 : vector<1x32x2xf32> to vector<32x2xf32>
    %49 = vector.broadcast %46 : vector<1x2xf32> to vector<32x2xf32>
    %50 = arith.mulf %49, %48 : vector<32x2xf32>
    %51 = arith.addf %45, %50 : vector<32x2xf32>
    %52 = vector.extract_strided_slice %27 {offsets = [4, 0], sizes = [1, 2], strides = [1, 1]} : vector<8x2xf32> to vector<1x2xf32>
    %c4 = arith.constant 4 : index
    %c0_24 = arith.constant 0 : index
    %c0_25 = arith.constant 0 : index
    %53 = vector.load %arg2[%c4, %c0_24, %c0_25] : memref<8x32x2xf32, #tpu.memory_space<vmem>>, vector<1x32x2xf32>
    %54 = vector.shape_cast %53 : vector<1x32x2xf32> to vector<32x2xf32>
    %55 = vector.broadcast %52 : vector<1x2xf32> to vector<32x2xf32>
    %56 = arith.mulf %55, %54 : vector<32x2xf32>
    %57 = arith.addf %51, %56 : vector<32x2xf32>
    %58 = vector.extract_strided_slice %27 {offsets = [5, 0], sizes = [1, 2], strides = [1, 1]} : vector<8x2xf32> to vector<1x2xf32>
    %c5 = arith.constant 5 : index
    %c0_26 = arith.constant 0 : index
    %c0_27 = arith.constant 0 : index
    %59 = vector.load %arg2[%c5, %c0_26, %c0_27] : memref<8x32x2xf32, #tpu.memory_space<vmem>>, vector<1x32x2xf32>
    %60 = vector.shape_cast %59 : vector<1x32x2xf32> to vector<32x2xf32>
    %61 = vector.broadcast %58 : vector<1x2xf32> to vector<32x2xf32>
    %62 = arith.mulf %61, %60 : vector<32x2xf32>
    %63 = arith.addf %57, %62 : vector<32x2xf32>
    %64 = vector.extract_strided_slice %27 {offsets = [6, 0], sizes = [1, 2], strides = [1, 1]} : vector<8x2xf32> to vector<1x2xf32>
    %c6 = arith.constant 6 : index
    %c0_28 = arith.constant 0 : index
    %c0_29 = arith.constant 0 : index
    %65 = vector.load %arg2[%c6, %c0_28, %c0_29] : memref<8x32x2xf32, #tpu.memory_space<vmem>>, vector<1x32x2xf32>
    %66 = vector.shape_cast %65 : vector<1x32x2xf32> to vector<32x2xf32>
    %67 = vector.broadcast %64 : vector<1x2xf32> to vector<32x2xf32>
    %68 = arith.mulf %67, %66 : vector<32x2xf32>
    %69 = arith.addf %63, %68 : vector<32x2xf32>
    %70 = vector.extract_strided_slice %27 {offsets = [7, 0], sizes = [1, 2], strides = [1, 1]} : vector<8x2xf32> to vector<1x2xf32>
    %c7 = arith.constant 7 : index
    %c0_30 = arith.constant 0 : index
    %c0_31 = arith.constant 0 : index
    %71 = vector.load %arg2[%c7, %c0_30, %c0_31] : memref<8x32x2xf32, #tpu.memory_space<vmem>>, vector<1x32x2xf32>
    %72 = vector.shape_cast %71 : vector<1x32x2xf32> to vector<32x2xf32>
    %73 = vector.broadcast %70 : vector<1x2xf32> to vector<32x2xf32>
    %74 = arith.mulf %73, %72 : vector<32x2xf32>
    %75 = arith.addf %69, %74 : vector<32x2xf32>
    %c0_32 = arith.constant 0 : index
    %c0_33 = arith.constant 0 : index
    %76 = vector.load %arg7[%c0_32, %c0_33] : memref<32x2xf32, #tpu.memory_space<vmem>>, vector<32x2xf32>
    tpu.vector_store %arg7[%c0_32, %c0_33], %75 {strides = array<i32>} : memref<32x2xf32, #tpu.memory_space<vmem>>, vector<32x2xf32>,
    return
  }
  func.func @transform_0(%arg0: i32) -> (i32, i32) {
    %c0_i32 = arith.constant 0 : i32
    %c0_i32_0 = arith.constant 0 : i32
    return %c0_i32, %arg0 : i32, i32
  }
  func.func @transform_1(%arg0: i32) -> (i32, i32, i32) {
    %c0_i32 = arith.constant 0 : i32
    %c0_i32_0 = arith.constant 0 : i32
    %c0_i32_1 = arith.constant 0 : i32
    return %c0_i32, %c0_i32_0, %arg0 : i32, i32, i32
  }
  func.func @transform_2(%arg0: i32) -> (i32, i32) {
    %c0_i32 = arith.constant 0 : i32
    %c0_i32_0 = arith.constant 0 : i32
    %c0_i32_1 = arith.constant 0 : i32
    return %c0_i32, %c0_i32_0 : i32, i32
  }
  func.func @transform_3(%arg0: i32) -> (i32, i32) {
    %c0_i32 = arith.constant 0 : i32
    %c0_i32_0 = arith.constant 0 : i32
    %c0_i32_1 = arith.constant 0 : i32
    return %c0_i32, %c0_i32_0 : i32, i32
  }
  func.func @transform_4(%arg0: i32) -> (i32, i32) {
    %c0_i32 = arith.constant 0 : i32
    %c0_i32_0 = arith.constant 0 : i32
    %c0_i32_1 = arith.constant 0 : i32
    return %c0_i32, %c0_i32_0 : i32, i32
  }
  func.func @transform_5(%arg0: i32) -> (i32, i32) {
    %c0_i32 = arith.constant 0 : i32
    %c0_i32_0 = arith.constant 0 : i32
    return %c0_i32, %arg0 : i32, i32
  }
  func.func @transform_6(%arg0: i32) -> (i32, i32) {
    %c0_i32 = arith.constant 0 : i32
    %c0_i32_0 = arith.constant 0 : i32
    return %c0_i32, %arg0 : i32, i32
  }
}

</mosaic_0001>

<llo_original>
// kernel: attention_forward.1
$region0: #{attention_forward.1}
  #allocation0 [shape = 'u32[]', space=smem, size = 0x4, offset = 0x4, fixed_abs, tag = 'smem constant byte address 0x4 - core index']
  #allocation1 [shape = 'u32[144,128]{1,0:T(1,128)}', space=vmem, size = 0x12000, scoped, tag = 'internal scratch']
  #allocation2 [shape = 'f32[1,1]{1,0:T(1,128)S(6)}', space=smem, size = 0x200, scoped, tag = 'scoped memory for attention_forward.1']
  %s0 = inlined_call_operand.vmem [shape: f32[32,2], index: 0, kind: input, shape index: {}]
  %s1 = inlined_call_operand.vmem [shape: f32[8,32,2], index: 1, kind: input, shape index: {}]
  %s2 = inlined_call_operand.vmem [shape: f32[32,1], index: 2, kind: input, shape index: {}]
  %s3 = inlined_call_operand.vmem [shape: f32[32,1], index: 3, kind: input, shape index: {}]
  %s4 = inlined_call_operand.<no memory space> [shape: f32[1,1], index: 4, kind: input, shape index: {}]
  %s5 = inlined_call_operand.vmem [shape: f32[8,2], index: 5, kind: output, shape index: {0}]
  %s6 = inlined_call_operand.vmem [shape: f32[32,2], index: 6, kind: output, shape index: {1}]
  %7 = xla_tuple %s5, %s6
  %s8 = sld [smem:[#allocation0]]
  $region38: #{attention_forward.1} parent=0
    _
  %s10 = ssub.s32 1, %s8
  %s11 = scalar_select 0, %s10, %s8
  %12 = sst [smem:[#allocation2]] %s4
  // Predicated region
  $region2: #{attention_forward.1} parent=0 // pred_check
    _
  $region3: #{attention_forward.1} parent=0 // pred_check_branch
    %14 = sbr.rel (0) target = $region5
  $region4: #{attention_forward.1} parent=0 // pred_region
    _
  $region5: #{attention_forward.1} parent=0 // pred_fallthru
    _
  // Predicated region
  $region6: #{attention_forward.1} parent=0 // pred_check
    _
  $region7: #{attention_forward.1} parent=0 // pred_check_branch
    %16 = sbr.rel (0) target = $region9
  $region8: #{attention_forward.1} parent=0 // pred_region
    _
  $region9: #{attention_forward.1} parent=0 // pred_fallthru
    _
  // Predicated region
  $region10: #{attention_forward.1} parent=0 // pred_check
    _
  $region11: #{attention_forward.1} parent=0 // pred_check_branch
    %18 = sbr.rel (0) target = $region13
  $region12: #{attention_forward.1} parent=0 // pred_region
    _
  $region13: #{attention_forward.1} parent=0 // pred_fallthru
    _
  // Predicated region
  $region14: #{attention_forward.1} parent=0 // pred_check
    _
  $region15: #{attention_forward.1} parent=0 // pred_check_branch
    %20 = sbr.rel (0) target = $region17
  $region16: #{attention_forward.1} parent=0 // pred_region
    _
  $region17: #{attention_forward.1} parent=0 // pred_fallthru
    _
  // Predicated region
  $region18: #{attention_forward.1} parent=0 // pred_check
    _
  $region19: #{attention_forward.1} parent=0 // pred_check_branch
    %22 = sbr.rel (0) target = $region21
  $region20: #{attention_forward.1} parent=0 // pred_region
    _
  $region21: #{attention_forward.1} parent=0 // pred_fallthru
    _
  %s23 = sld [smem:[#allocation2]]
  %v24 = vld [vmem:[%s2] sm:$0xff]
  %v25 = vld [vmem:[%s2 + $0x8] sm:$0xff]
  %v26 = vld [vmem:[%s2 + $0x10] sm:$0xff]
  %v27 = vld [vmem:[%s2 + $0x18] sm:$0xff]
  %v28 = vld [vmem:[%s3] sm:$0xff]
  %v29 = vld [vmem:[%s3 + $0x8] sm:$0xff]
  %v30 = vld [vmem:[%s3 + $0x10] sm:$0xff]
  %v31 = vld [vmem:[%s3 + $0x18] sm:$0xff]
  %v32 = vld [vmem:[%s0] sm:$0xff]
  %v33 = vld [vmem:[%s0 + $0x8] sm:$0xff]
  %v34 = vld [vmem:[%s0 + $0x10] sm:$0xff]
  %v35 = vld [vmem:[%s0 + $0x18] sm:$0xff]
  %37 = vset.pattern.permute.xlu0 0
  %38 = vperm.xlu0 %37, %v24
  %v39 = vpop.permute.xlu0 %38
  %42 = vset.pattern.permute.xlu0 0
  %43 = vperm.xlu0 %42, %v25
  %v44 = vpop.permute.xlu0 %43
  %47 = vset.pattern.permute.xlu0 0
  %48 = vperm.xlu0 %47, %v26
  %v49 = vpop.permute.xlu0 %48
  %52 = vset.pattern.permute.xlu0 0
  %53 = vperm.xlu0 %52, %v27
  %v54 = vpop.permute.xlu0 %53
  %v56 = vmul.f32 %v32, %v39
  %v57 = vmul.f32 %v33, %v44
  %v58 = vmul.f32 %v34, %v49
  %v59 = vmul.f32 %v35, %v54
  %vm60 = vcmask 15360
  %v61 = vsel %vm60, %v56, 0.0
  %v62 = vsel %vm60, %v57, 0.0
  %v63 = vadd.f32 %v61, %v62
  %v64 = vsel %vm60, %v58, 0.0
  %v65 = vadd.f32 %v63, %v64
  %v66 = vsel %vm60, %v59, 0.0
  %v67 = vadd.f32 %v65, %v66
  %v68 = vrot.slane %v67, 4
  %v69 = vadd.f32 %v67, %v68
  %v70 = vrot.slane %v69, 2
  %v71 = vadd.f32 %v69, %v70
  %v72 = vrot.slane %v71, 1
  %v73 = vadd.f32 %v71, %v72
  %v74 = vld [vmem:[%s1] sm:$0xff]
  %v75 = vld [vmem:[%s1 + $0x8] sm:$0xff]
  %v76 = vld [vmem:[%s1 + $0x10] sm:$0xff]
  %v77 = vld [vmem:[%s1 + $0x18] sm:$0xff]
  %v78 = vld [vmem:[%s1 + $0x20] sm:$0xff]
  %v79 = vld [vmem:[%s1 + $0x28] sm:$0xff]
  %v80 = vld [vmem:[%s1 + $0x30] sm:$0xff]
  %v81 = vld [vmem:[%s1 + $0x38] sm:$0xff]
  %v82 = vld [vmem:[%s1 + $0x40] sm:$0xff]
  %v83 = vld [vmem:[%s1 + $0x48] sm:$0xff]
  %v84 = vld [vmem:[%s1 + $0x50] sm:$0xff]
  %v85 = vld [vmem:[%s1 + $0x58] sm:$0xff]
  %v86 = vld [vmem:[%s1 + $0x60] sm:$0xff]
  %v87 = vld [vmem:[%s1 + $0x68] sm:$0xff]
  %v88 = vld [vmem:[%s1 + $0x70] sm:$0xff]
  %v89 = vld [vmem:[%s1 + $0x78] sm:$0xff]
  %v90 = vld [vmem:[%s1 + $0x80] sm:$0xff]
  %v91 = vld [vmem:[%s1 + $0x88] sm:$0xff]
  %v92 = vld [vmem:[%s1 + $0x90] sm:$0xff]
  %v93 = vld [vmem:[%s1 + $0x98] sm:$0xff]
  %v94 = vld [vmem:[%s1 + $0xa0] sm:$0xff]
  %v95 = vld [vmem:[%s1 + $0xa8] sm:$0xff]
  %v96 = vld [vmem:[%s1 + $0xb0] sm:$0xff]
  %v97 = vld [vmem:[%s1 + $0xb8] sm:$0xff]
  %v98 = vld [vmem:[%s1 + $0xc0] sm:$0xff]
  %v99 = vld [vmem:[%s1 + $0xc8] sm:$0xff]
  %v100 = vld [vmem:[%s1 + $0xd0] sm:$0xff]
  %v101 = vld [vmem:[%s1 + $0xd8] sm:$0xff]
  %v102 = vld [vmem:[%s1 + $0xe0] sm:$0xff]
  %v103 = vld [vmem:[%s1 + $0xe8] sm:$0xff]
  %v104 = vld [vmem:[%s1 + $0xf0] sm:$0xff]
  %v105 = vld [vmem:[%s1 + $0xf8] sm:$0xff]
  %107 = vset.pattern.permute.xlu0 0
  %108 = vperm.xlu0 %107, %v28
  %v109 = vpop.permute.xlu0 %108
  %112 = vset.pattern.permute.xlu0 0
  %113 = vperm.xlu0 %112, %v29
  %v114 = vpop.permute.xlu0 %113
  %117 = vset.pattern.permute.xlu0 0
  %118 = vperm.xlu0 %117, %v30
  %v119 = vpop.permute.xlu0 %118
  %122 = vset.pattern.permute.xlu0 0
  %123 = vperm.xlu0 %122, %v31
  %v124 = vpop.permute.xlu0 %123
  %v126 = vmul.f32 %v74, %v109
  %v127 = vmul.f32 %v75, %v114
  %v128 = vmul.f32 %v76, %v119
  %v129 = vmul.f32 %v77, %v124
  %v130 = vmul.f32 %v78, %v109
  %v131 = vmul.f32 %v79, %v114
  %v132 = vmul.f32 %v80, %v119
  %v133 = vmul.f32 %v81, %v124
  %v134 = vmul.f32 %v82, %v109
  %v135 = vmul.f32 %v83, %v114
  %v136 = vmul.f32 %v84, %v119
  %v137 = vmul.f32 %v85, %v124
  %v138 = vmul.f32 %v86, %v109
  %v139 = vmul.f32 %v87, %v114
  %v140 = vmul.f32 %v88, %v119
  %v141 = vmul.f32 %v89, %v124
  %v142 = vmul.f32 %v90, %v109
  %v143 = vmul.f32 %v91, %v114
  %v144 = vmul.f32 %v92, %v119
  %v145 = vmul.f32 %v93, %v124
  %v146 = vmul.f32 %v94, %v109
  %v147 = vmul.f32 %v95, %v114
  %v148 = vmul.f32 %v96, %v119
  %v149 = vmul.f32 %v97, %v124
  %v150 = vmul.f32 %v98, %v109
  %v151 = vmul.f32 %v99, %v114
  %v152 = vmul.f32 %v100, %v119
  %v153 = vmul.f32 %v101, %v124
  %v154 = vmul.f32 %v102, %v109
  %v155 = vmul.f32 %v103, %v114
  %v156 = vmul.f32 %v104, %v119
  %v157 = vmul.f32 %v105, %v124
  %v158 = vsel %vm60, %v126, 0.0
  %v159 = vsel %vm60, %v127, 0.0
  %v160 = vadd.f32 %v158, %v159
  %v161 = vsel %vm60, %v128, 0.0
  %v162 = vadd.f32 %v160, %v161
  %v163 = vsel %vm60, %v129, 0.0
  %v164 = vadd.f32 %v162, %v163
  %v165 = vrot.slane %v164, 4
  %v166 = vadd.f32 %v164, %v165
  %v167 = vrot.slane %v166, 2
  %v168 = vadd.f32 %v166, %v167
  %v169 = vrot.slane %v168, 1
  %v170 = vadd.f32 %v168, %v169
  %v171 = vsel %vm60, %v130, 0.0
  %v172 = vsel %vm60, %v131, 0.0
  %v173 = vadd.f32 %v171, %v172
  %v174 = vsel %vm60, %v132, 0.0
  %v175 = vadd.f32 %v173, %v174
  %v176 = vsel %vm60, %v133, 0.0
  %v177 = vadd.f32 %v175, %v176
  %v178 = vrot.slane %v177, 4
  %v179 = vadd.f32 %v177, %v178
  %v180 = vrot.slane %v179, 2
  %v181 = vadd.f32 %v179, %v180
  %v182 = vrot.slane %v181, 1
  %v183 = vadd.f32 %v181, %v182
  %v184 = vsel %vm60, %v134, 0.0
  %v185 = vsel %vm60, %v135, 0.0
  %v186 = vadd.f32 %v184, %v185
  %v187 = vsel %vm60, %v136, 0.0
  %v188 = vadd.f32 %v186, %v187
  %v189 = vsel %vm60, %v137, 0.0
  %v190 = vadd.f32 %v188, %v189
  %v191 = vrot.slane %v190, 4
  %v192 = vadd.f32 %v190, %v191
  %v193 = vrot.slane %v192, 2
  %v194 = vadd.f32 %v192, %v193
  %v195 = vrot.slane %v194, 1
  %v196 = vadd.f32 %v194, %v195
  %v197 = vsel %vm60, %v138, 0.0
  %v198 = vsel %vm60, %v139, 0.0
  %v199 = vadd.f32 %v197, %v198
  %v200 = vsel %vm60, %v140, 0.0
  %v201 = vadd.f32 %v199, %v200
  %v202 = vsel %vm60, %v141, 0.0
  %v203 = vadd.f32 %v201, %v202
  %v204 = vrot.slane %v203, 4
  %v205 = vadd.f32 %v203, %v204
  %v206 = vrot.slane %v205, 2
  %v207 = vadd.f32 %v205, %v206
  %v208 = vrot.slane %v207, 1
  %v209 = vadd.f32 %v207, %v208
  %v210 = vsel %vm60, %v142, 0.0
  %v211 = vsel %vm60, %v143, 0.0
  %v212 = vadd.f32 %v210, %v211
  %v213 = vsel %vm60, %v144, 0.0
  %v214 = vadd.f32 %v212, %v213
  %v215 = vsel %vm60, %v145, 0.0
  %v216 = vadd.f32 %v214, %v215
  %v217 = vrot.slane %v216, 4
  %v218 = vadd.f32 %v216, %v217
  %v219 = vrot.slane %v218, 2
  %v220 = vadd.f32 %v218, %v219
  %v221 = vrot.slane %v220, 1
  %v222 = vadd.f32 %v220, %v221
  %v223 = vsel %vm60, %v146, 0.0
  %v224 = vsel %vm60, %v147, 0.0
  %v225 = vadd.f32 %v223, %v224
  %v226 = vsel %vm60, %v148, 0.0
  %v227 = vadd.f32 %v225, %v226
  %v228 = vsel %vm60, %v149, 0.0
  %v229 = vadd.f32 %v227, %v228
  %v230 = vrot.slane %v229, 4
  %v231 = vadd.f32 %v229, %v230
  %v232 = vrot.slane %v231, 2
  %v233 = vadd.f32 %v231, %v232
  %v234 = vrot.slane %v233, 1
  %v235 = vadd.f32 %v233, %v234
  %v236 = vsel %vm60, %v150, 0.0
  %v237 = vsel %vm60, %v151, 0.0
  %v238 = vadd.f32 %v236, %v237
  %v239 = vsel %vm60, %v152, 0.0
  %v240 = vadd.f32 %v238, %v239
  %v241 = vsel %vm60, %v153, 0.0
  %v242 = vadd.f32 %v240, %v241
  %v243 = vrot.slane %v242, 4
  %v244 = vadd.f32 %v242, %v243
  %v245 = vrot.slane %v244, 2
  %v246 = vadd.f32 %v244, %v245
  %v247 = vrot.slane %v246, 1
  %v248 = vadd.f32 %v246, %v247
  %v249 = vsel %vm60, %v154, 0.0
  %v250 = vsel %vm60, %v155, 0.0
  %v251 = vadd.f32 %v249, %v250
  %v252 = vsel %vm60, %v156, 0.0
  %v253 = vadd.f32 %v251, %v252
  %v254 = vsel %vm60, %v157, 0.0
  %v255 = vadd.f32 %v253, %v254
  %v256 = vrot.slane %v255, 4
  %v257 = vadd.f32 %v255, %v256
  %v258 = vrot.slane %v257, 2
  %v259 = vadd.f32 %v257, %v258
  %v260 = vrot.slane %v259, 1
  %v261 = vadd.f32 %v259, %v260
  %v262 = vadd.f32 %v170, %v73
  %v263 = vadd.f32 %v183, %v73
  %v264 = vadd.f32 %v196, %v73
  %v265 = vadd.f32 %v209, %v73
  %v266 = vadd.f32 %v222, %v73
  %v267 = vadd.f32 %v235, %v73
  %v268 = vadd.f32 %v248, %v73
  %v269 = vadd.f32 %v261, %v73
  %v270 = vstv %s23
  %v271 = vadd.f32 %v262, %v270
  %v272 = vadd.f32 %v263, %v270
  %v273 = vadd.f32 %v264, %v270
  %v274 = vadd.f32 %v265, %v270
  %v275 = vadd.f32 %v266, %v270
  %v276 = vadd.f32 %v267, %v270
  %v277 = vadd.f32 %v268, %v270
  %v278 = vadd.f32 %v269, %v270
  %v279 = vtanh.pop %v271
  %v280 = vtanh.pop %v272
  %v281 = vtanh.pop %v273
  %v282 = vtanh.pop %v274
  %v283 = vtanh.pop %v275
  %v284 = vtanh.pop %v276
  %v285 = vtanh.pop %v277
  %v286 = vtanh.pop %v278
  %vm287 = vcmask 8192
  %v288 = vsel %vm287, %v279, -inf
  %v289 = vsel %vm287, %v280, -inf
  %v290 = vsel %vm287, %v281, -inf
  %v291 = vsel %vm287, %v282, -inf
  %v292 = vsel %vm287, %v283, -inf
  %v293 = vmax.f32 %v288, %v292
  %v294 = vsel %vm287, %v284, -inf
  %v295 = vmax.f32 %v289, %v294
  %v296 = vsel %vm287, %v285, -inf
  %v297 = vmax.f32 %v290, %v296
  %v298 = vsel %vm287, %v286, -inf
  %v299 = vmax.f32 %v291, %v298
  %v300 = vmax.f32 %v293, %v295
  %v301 = vmax.f32 %v297, %v299
  %v302 = vmax.f32 %v300, %v301
  %v303 = vlaneseq
  %v304 = vshrl.u32 %v303, 7
  %v305 = vsub.s32 0, %v304
  %v306 = vrot.slane %v302, %v305
  %v307 = vsub.f32 %v279, %v306
  %v308 = vsub.f32 %v280, %v306
  %v309 = vsub.f32 %v281, %v306
  %v310 = vsub.f32 %v282, %v306
  %v311 = vsub.f32 %v283, %v306
  %v312 = vsub.f32 %v284, %v306
  %v313 = vsub.f32 %v285, %v306
  %v314 = vsub.f32 %v286, %v306
  %v315 = vmul.f32 %v307, 1.442695
  %v316 = vpow.pop %v315
  %v317 = vmul.f32 %v308, 1.442695
  %v318 = vpow.pop %v317
  %v319 = vmul.f32 %v309, 1.442695
  %v320 = vpow.pop %v319
  %v321 = vmul.f32 %v310, 1.442695
  %v322 = vpow.pop %v321
  %v323 = vmul.f32 %v311, 1.442695
  %v324 = vpow.pop %v323
  %v325 = vmul.f32 %v312, 1.442695
  %v326 = vpow.pop %v325
  %v327 = vmul.f32 %v313, 1.442695
  %v328 = vpow.pop %v327
  %v329 = vmul.f32 %v314, 1.442695
  %v330 = vpow.pop %v329
  %v339 = vrot.slane %v318, 7
  %vm340 = vcmask 1041409
  %v341 = vsel %vm340, %v339, %v316
  %v342 = vrot.slane %v320, 6
  %vm343 = vcmask 1042434
  %v344 = vsel %vm343, %v342, %v341
  %v345 = vrot.slane %v322, 5
  %vm346 = vcmask 1043459
  %v347 = vsel %vm346, %v345, %v344
  %v348 = vrot.slane %v324, 4
  %vm349 = vcmask 1044484
  %v350 = vsel %vm349, %v348, %v347
  %v351 = vrot.slane %v326, 3
  %vm352 = vcmask 1045509
  %v353 = vsel %vm352, %v351, %v350
  %v354 = vrot.slane %v328, 2
  %vm355 = vcmask 1046534
  %v356 = vsel %vm355, %v354, %v353
  %v357 = vrot.slane %v330, 1
  %vm358 = vcmask 1047559
  %v359 = vsel %vm358, %v357, %v356
  %v361 = vsel %vm60, %v359, 0.0
  %v362 = vrot.slane %v361, 4
  %v363 = vadd.f32 %v361, %v362
  %v364 = vrot.slane %v363, 2
  %v365 = vadd.f32 %v363, %v364
  %v366 = vrot.slane %v365, 1
  %v367 = vadd.f32 %v365, %v366
  %v368 = vrcp.pop %v367
  %v369 = vlaneseq
  %v370 = vshrl.u32 %v369, 7
  %v371 = vsub.s32 0, %v370
  %v372 = vrot.slane %v368, %v371
  %v373 = vmul.f32 %v316, %v372
  %v374 = vmul.f32 %v318, %v372
  %v375 = vmul.f32 %v320, %v372
  %v376 = vmul.f32 %v322, %v372
  %v377 = vmul.f32 %v324, %v372
  %v378 = vmul.f32 %v326, %v372
  %v379 = vmul.f32 %v328, %v372
  %v380 = vmul.f32 %v330, %v372
  %v389 = vrot.slane %v374, 7
  %v390 = vsel %vm340, %v389, %v373
  %v391 = vrot.slane %v375, 6
  %v392 = vsel %vm343, %v391, %v390
  %v393 = vrot.slane %v376, 5
  %v394 = vsel %vm346, %v393, %v392
  %v395 = vrot.slane %v377, 4
  %v396 = vsel %vm349, %v395, %v394
  %v397 = vrot.slane %v378, 3
  %v398 = vsel %vm352, %v397, %v396
  %v399 = vrot.slane %v379, 2
  %v400 = vsel %vm355, %v399, %v398
  %v401 = vrot.slane %v380, 1
  %v402 = vsel %vm358, %v401, %v400
  %404 = vst.msk [vmem:[%s5] sm:$0xff] %vm60, %v402
  %v405 = vld [vmem:[%s1] sm:$0xff]
  %v406 = vld [vmem:[%s1 + $0x8] sm:$0xff]
  %v407 = vld [vmem:[%s1 + $0x10] sm:$0xff]
  %v408 = vld [vmem:[%s1 + $0x18] sm:$0xff]
  %v409 = vlaneseq
  %v410 = vshrl.u32 %v409, 7
  %v411 = vsub.s32 0, %v410
  %v412 = vrot.slane %v373, %v411
  %v413 = vmul.f32 %v412, %v405
  %v414 = vmul.f32 %v412, %v406
  %v415 = vmul.f32 %v412, %v407
  %v416 = vmul.f32 %v412, %v408
  %s417 = scalar_lea.vmem %s1, 32
  %v418 = vld [vmem:[%s417] sm:$0xff]
  %v419 = vld [vmem:[%s417 + $0x8] sm:$0xff]
  %v420 = vld [vmem:[%s417 + $0x10] sm:$0xff]
  %v421 = vld [vmem:[%s417 + $0x18] sm:$0xff]
  %v422 = vlaneseq
  %v423 = vshrl.u32 %v422, 7
  %v424 = vsub.s32 0, %v423
  %v425 = vrot.slane %v374, %v424
  %v426 = vmul.f32 %v425, %v418
  %v427 = vmul.f32 %v425, %v419
  %v428 = vmul.f32 %v425, %v420
  %v429 = vmul.f32 %v425, %v421
  %v430 = vadd.f32 %v413, %v426
  %v431 = vadd.f32 %v414, %v427
  %v432 = vadd.f32 %v415, %v428
  %v433 = vadd.f32 %v416, %v429
  %s434 = scalar_lea.vmem %s1, 64
  %v435 = vld [vmem:[%s434] sm:$0xff]
  %v436 = vld [vmem:[%s434 + $0x8] sm:$0xff]
  %v437 = vld [vmem:[%s434 + $0x10] sm:$0xff]
  %v438 = vld [vmem:[%s434 + $0x18] sm:$0xff]
  %v439 = vlaneseq
  %v440 = vshrl.u32 %v439, 7
  %v441 = vsub.s32 0, %v440
  %v442 = vrot.slane %v375, %v441
  %v443 = vmul.f32 %v442, %v435
  %v444 = vmul.f32 %v442, %v436
  %v445 = vmul.f32 %v442, %v437
  %v446 = vmul.f32 %v442, %v438
  %v447 = vadd.f32 %v430, %v443
  %v448 = vadd.f32 %v431, %v444
  %v449 = vadd.f32 %v432, %v445
  %v450 = vadd.f32 %v433, %v446
  %s451 = scalar_lea.vmem %s1, 96
  %v452 = vld [vmem:[%s451] sm:$0xff]
  %v453 = vld [vmem:[%s451 + $0x8] sm:$0xff]
  %v454 = vld [vmem:[%s451 + $0x10] sm:$0xff]
  %v455 = vld [vmem:[%s451 + $0x18] sm:$0xff]
  %v456 = vlaneseq
  %v457 = vshrl.u32 %v456, 7
  %v458 = vsub.s32 0, %v457
  %v459 = vrot.slane %v376, %v458
  %v460 = vmul.f32 %v459, %v452
  %v461 = vmul.f32 %v459, %v453
  %v462 = vmul.f32 %v459, %v454
  %v463 = vmul.f32 %v459, %v455
  %v464 = vadd.f32 %v447, %v460
  %v465 = vadd.f32 %v448, %v461
  %v466 = vadd.f32 %v449, %v462
  %v467 = vadd.f32 %v450, %v463
  %s468 = scalar_lea.vmem %s1, 128
  %v469 = vld [vmem:[%s468] sm:$0xff]
  %v470 = vld [vmem:[%s468 + $0x8] sm:$0xff]
  %v471 = vld [vmem:[%s468 + $0x10] sm:$0xff]
  %v472 = vld [vmem:[%s468 + $0x18] sm:$0xff]
  %v473 = vlaneseq
  %v474 = vshrl.u32 %v473, 7
  %v475 = vsub.s32 0, %v474
  %v476 = vrot.slane %v377, %v475
  %v477 = vmul.f32 %v476, %v469
  %v478 = vmul.f32 %v476, %v470
  %v479 = vmul.f32 %v476, %v471
  %v480 = vmul.f32 %v476, %v472
  %v481 = vadd.f32 %v464, %v477
  %v482 = vadd.f32 %v465, %v478
  %v483 = vadd.f32 %v466, %v479
  %v484 = vadd.f32 %v467, %v480
  %s485 = scalar_lea.vmem %s1, 160
  %v486 = vld [vmem:[%s485] sm:$0xff]
  %v487 = vld [vmem:[%s485 + $0x8] sm:$0xff]
  %v488 = vld [vmem:[%s485 + $0x10] sm:$0xff]
  %v489 = vld [vmem:[%s485 + $0x18] sm:$0xff]
  %v490 = vlaneseq
  %v491 = vshrl.u32 %v490, 7
  %v492 = vsub.s32 0, %v491
  %v493 = vrot.slane %v378, %v492
  %v494 = vmul.f32 %v493, %v486
  %v495 = vmul.f32 %v493, %v487
  %v496 = vmul.f32 %v493, %v488
  %v497 = vmul.f32 %v493, %v489
  %v498 = vadd.f32 %v481, %v494
  %v499 = vadd.f32 %v482, %v495
  %v500 = vadd.f32 %v483, %v496
  %v501 = vadd.f32 %v484, %v497
  %s502 = scalar_lea.vmem %s1, 192
  %v503 = vld [vmem:[%s502] sm:$0xff]
  %v504 = vld [vmem:[%s502 + $0x8] sm:$0xff]
  %v505 = vld [vmem:[%s502 + $0x10] sm:$0xff]
  %v506 = vld [vmem:[%s502 + $0x18] sm:$0xff]
  %v507 = vlaneseq
  %v508 = vshrl.u32 %v507, 7
  %v509 = vsub.s32 0, %v508
  %v510 = vrot.slane %v379, %v509
  %v511 = vmul.f32 %v510, %v503
  %v512 = vmul.f32 %v510, %v504
  %v513 = vmul.f32 %v510, %v505
  %v514 = vmul.f32 %v510, %v506
  %v515 = vadd.f32 %v498, %v511
  %v516 = vadd.f32 %v499, %v512
  %v517 = vadd.f32 %v500, %v513
  %v518 = vadd.f32 %v501, %v514
  %s519 = scalar_lea.vmem %s1, 224
  %v520 = vld [vmem:[%s519] sm:$0xff]
  %v521 = vld [vmem:[%s519 + $0x8] sm:$0xff]
  %v522 = vld [vmem:[%s519 + $0x10] sm:$0xff]
  %v523 = vld [vmem:[%s519 + $0x18] sm:$0xff]
  %v524 = vlaneseq
  %v525 = vshrl.u32 %v524, 7
  %v526 = vsub.s32 0, %v525
  %v527 = vrot.slane %v380, %v526
  %v528 = vmul.f32 %v527, %v520
  %v529 = vmul.f32 %v527, %v521
  %v530 = vmul.f32 %v527, %v522
  %v531 = vmul.f32 %v527, %v523
  %v532 = vadd.f32 %v515, %v528
  %v533 = vadd.f32 %v516, %v529
  %v534 = vadd.f32 %v517, %v530
  %v535 = vadd.f32 %v518, %v531
  %536 = vst.msk [vmem:[%s6] sm:$0xff] %vm60, %v532
  %537 = vst.msk [vmem:[%s6 + $0x8] sm:$0xff] %vm60, %v533
  %538 = vst.msk [vmem:[%s6 + $0x10] sm:$0xff] %vm60, %v534
  %539 = vst.msk [vmem:[%s6 + $0x18] sm:$0xff] %vm60, %v535
  // Predicated region
  $region22: #{attention_forward.1} parent=0 // pred_check
    _
  $region23: #{attention_forward.1} parent=0 // pred_check_branch
    %541 = sbr.rel (0) target = $region25
  $region24: #{attention_forward.1} parent=0 // pred_region
    _
  $region25: #{attention_forward.1} parent=0 // pred_fallthru
    _
  // Predicated region
  $region26: #{attention_forward.1} parent=0 // pred_check
    _
  $region27: #{attention_forward.1} parent=0 // pred_check_branch
    %543 = sbr.rel (0) target = $region29
  $region28: #{attention_forward.1} parent=0 // pred_region
    _
  $region29: #{attention_forward.1} parent=0 // pred_fallthru
    _
  // Predicated region
  $region30: #{attention_forward.1} parent=0 // pred_check
    _
  $region31: #{attention_forward.1} parent=0 // pred_check_branch
    %545 = sbr.rel (0) target = $region33
  $region32: #{attention_forward.1} parent=0 // pred_region
    _
  $region33: #{attention_forward.1} parent=0 // pred_fallthru
    _
  // Predicated region
  $region34: #{attention_forward.1} parent=0 // pred_check
    _
  $region35: #{attention_forward.1} parent=0 // pred_check_branch
    %547 = sbr.rel (0) target = $region37
  $region36: #{attention_forward.1} parent=0 // pred_region
    _
  $region37: #{attention_forward.1} parent=0 // pred_fallthru
    _

</llo_original>
